<compile_context>
chip_gen: v5e
topology: v5e:2x2
jax: 0.10.0
libtpu: 0.0.40
codegen_flags: <defaults>
</compile_context>

<pallas_src>
import functools
import math

import jax
import jax.numpy as jnp
from jax import lax
from jax.experimental import pallas as pl
from jax.experimental.pallas import tpu as pltpu

# Total bytes allowed for the (double-buffered) input + output blocks of one
# pallas_call.  8 MiB keeps comfortable headroom under v5e's 16 MiB scoped
# VMEM default (and far under v6e/v7x's 32 MiB scoped limit).
_VMEM_BLOCK_BUDGET = 8 * 1024 * 1024


def _sublane_tile(dtype) -> int:
    """Native sublane tile: 8 rows for 4-byte, 16 for 2-byte, 32 for 1-byte."""
    return max(8, 32 // jnp.dtype(dtype).itemsize)


def _pick_rows(n_rows, bytes_per_row, sublane, cap=None) -> int:
    """Largest row-block fitting the VMEM budget, rounded to the sublane tile."""
    rows = _VMEM_BLOCK_BUDGET // max(bytes_per_row, 1)
    if cap is not None:
        rows = min(rows, cap)
    rows = max(rows, 1)
    if rows >= n_rows:
        return n_rows                      # single block == full dim (always legal)
    rows = max((rows // sublane) * sublane, min(sublane, n_rows))
    return min(rows, n_rows)


def _shift_kernel(x_ref, o_ref, *, start, keeplen, axis):
    """Shift one block along `axis` by `start` with zero fill.

    The shifted block is assembled in registers (static slice + concat run on
    the XLU/VPU) and written back with a single full-width, lane-dense store.
    """
    x = x_ref[...]
    n = abs(start)
    zshape = list(x.shape)
    zshape[axis] = n
    zeros = jnp.zeros(zshape, x.dtype)
    if start > 0:
        body = lax.slice_in_dim(x, 0, x.shape[axis] - start, axis=axis) if keeplen else x
        y = jnp.concatenate([zeros, body], axis=axis)
    else:  # start < 0  (start == 0 never reaches the kernel)
        body = lax.slice_in_dim(x, n, x.shape[axis], axis=axis)
        y = jnp.concatenate([body, zeros], axis=axis) if keeplen else body
    o_ref[...] = y


def _delay_last_axis(x2, start, keeplen, t_out, max_block_rows):
    """Delay along the last (lane) axis of a 2-D (B, T) slab."""
    b, t = x2.shape
    itemsize = x2.dtype.itemsize
    sub = _sublane_tile(x2.dtype)
    # double-buffered input block + double-buffered output block, per row
    bytes_per_row = 2 * (t + t_out) * itemsize
    tb = _pick_rows(b, bytes_per_row, sub, max_block_rows)
    # TODO(synk): for extremely long T, also tile T and fold the shift into the
    # input index_map instead of shrinking the row block below the sublane tile.
    kernel = functools.partial(_shift_kernel, start=start, keeplen=keeplen, axis=1)
    return pl.pallas_call(
        kernel,
        out_shape=jax.ShapeDtypeStruct((b, t_out), x2.dtype),
        grid=(pl.cdiv(b, tb),),
        in_specs=[pl.BlockSpec((tb, t), lambda i: (i, 0))],
        out_specs=pl.BlockSpec((tb, t_out), lambda i: (i, 0)),
        compiler_params=pltpu.CompilerParams(dimension_semantics=("parallel",)),
        cost_estimate=pl.CostEstimate(
            flops=0, transcendentals=0,
            bytes_accessed=(b * t + b * t_out) * itemsize),
    )(x2)


def _delay_middle_axis(x3, start, keeplen, s_out, max_block_rows):
    """Delay along the middle axis of a 3-D (P, S, Q) slab (lane axis untouched)."""
    p, s, q = x3.shape
    itemsize = x3.dtype.itemsize
    tq = q if q <= 512 else 512            # 512 is a multiple of 128 -> legal lane block
    bytes_per_p = 2 * (s + s_out) * tq * itemsize
    tp = _pick_rows(p, bytes_per_p, 1, max_block_rows)
    kernel = functools.partial(_shift_kernel, start=start, keeplen=keeplen, axis=1)
    return pl.pallas_call(
        kernel,
        out_shape=jax.ShapeDtypeStruct((p, s_out, q), x3.dtype),
        grid=(pl.cdiv(p, tp), pl.cdiv(q, tq)),
        in_specs=[pl.BlockSpec((tp, s, tq), lambda i, j: (i, 0, j))],
        out_specs=pl.BlockSpec((tp, s_out, tq), lambda i, j: (i, 0, j)),
        compiler_params=pltpu.CompilerParams(
            dimension_semantics=("parallel", "parallel")),
        cost_estimate=pl.CostEstimate(
            flops=0, transcendentals=0,
            bytes_accessed=(p * s * q + p * s_out * q) * itemsize),
    )(x3)


def delay(x, start, keeplen=False, dim=-1, *, max_block_rows=None):
    """Pallas-backed equivalent of diffsptk.Delay(start, keeplen, dim)(x)."""
    ndim = x.ndim
    dim = dim % ndim
    s = x.shape[dim]
    assert abs(start) <= s, "|start| must not exceed the signal length along `dim`"

    # Degenerate cases: no kernel, no HBM round-trip.
    if start == 0:
        return x
    if abs(start) == s:
        if keeplen:
            return jnp.zeros_like(x)
        if start < 0:
            shape = list(x.shape)
            shape[dim] = 0
            return jnp.zeros(shape, x.dtype)
        # start == +s, not keeplen: handled by the kernel (no zero-size ops).

    s_out = s if keeplen else s + start

    if dim == ndim - 1:
        lead = x.shape[:-1]
        b = int(math.prod(lead)) if lead else 1
        y2 = _delay_last_axis(x.reshape(b, s), start, keeplen, s_out, max_block_rows)
        return y2.reshape(lead + (s_out,))

    # Non-last delay axis: keep the original memory layout (free reshapes only,
    # no HBM transpose) and shift along the middle axis of a (P, S, Q) view.
    p = int(math.prod(x.shape[:dim])) if dim > 0 else 1
    q = int(math.prod(x.shape[dim + 1:]))
    y3 = _delay_middle_axis(x.reshape(p, s, q), start, keeplen, s_out, max_block_rows)
    return y3.reshape(x.shape[:dim] + (s_out,) + x.shape[dim + 1:])


def _delay_ref(x, start, keeplen=False, dim=-1):
    """Pure-JAX reference mirroring the PyTorch code (for verification)."""
    d = dim % x.ndim
    if start > 0 or keeplen:
        shape = list(x.shape)
        shape[d] = abs(start)
        zeros = jnp.zeros(shape, dtype=x.dtype)
    if start > 0:
        y = jnp.concatenate((zeros, x), axis=d)
        if keeplen:
            y = lax.slice_in_dim(y, 0, y.shape[d] - start, axis=d)
        return y
    if start < 0:
        y = lax.slice_in_dim(x, -start, x.shape[d], axis=d)
        if keeplen:
            y = jnp.concatenate((y, zeros), axis=d)
        return y
    return x


if __name__ == "__main__":
    ok = True

    def check(xv, cfg, cap=None):
        global ok
        y = jax.block_until_ready(delay(xv, **cfg, max_block_rows=cap))
        y_ref = _delay_ref(xv, **cfg)
        if y.shape != y_ref.shape or not bool(jnp.array_equal(y, y_ref)):
            ok = False
            print("MISMATCH", tuple(xv.shape), str(xv.dtype), cfg, "cap=", cap)

    # Small canonical input: (batch=2, channels=4, T=16), f32.
    x = jax.random.normal(jax.random.PRNGKey(0), (2, 4, 16), dtype=jnp.float32)
    for cfg in [
        dict(start=2, keeplen=False, dim=-1),
        dict(start=2, keeplen=True, dim=-1),
        dict(start=-3, keeplen=False, dim=-1),
        dict(start=-3, keeplen=True, dim=-1),
        dict(start=0, keeplen=False, dim=-1),
        dict(start=2, keeplen=True, dim=1),      # delay along the channel axis
        dict(start=16, keeplen=False, dim=-1),   # full-length delay
        dict(start=-16, keeplen=True, dim=-1),   # fully advanced, keeplen
    ]:
        check(x, cfg)

    # Larger input with a small row cap to exercise a real multi-step (ragged)
    # grid along the batch-like axis on both code paths.
    xb = jax.random.normal(jax.random.PRNGKey(1), (6, 5, 64), dtype=jnp.float32)
    check(xb, dict(start=3, keeplen=False, dim=-1), cap=8)   # B=30 -> 4 ragged blocks
    check(xb, dict(start=-2, keeplen=True, dim=-1), cap=8)
    check(xb, dict(start=2, keeplen=True, dim=1), cap=4)     # P=6 -> ragged along P
    check(xb, dict(start=-1, keeplen=False, dim=0), cap=2)

    # bf16 path (16-row sublane tile).
    xh = jax.random.normal(jax.random.PRNGKey(2), (2, 4, 32)).astype(jnp.bfloat16)
    check(xh, dict(start=5, keeplen=True, dim=-1))
    check(xh, dict(start=-4, keeplen=False, dim=-1))

    if ok:
        print("KERNEL_OK")
</pallas_src>

<mosaic_0001>
module attributes {stable_mosaic.version = 11 : i64} {
  func.func @_shift_kernel(%arg0: i32, %arg1: memref<8x16xf32, #tpu.memory_space<vmem>>, %arg2: memref<8x18xf32, #tpu.memory_space<vmem>>) attributes {dimension_semantics = [#tpu.dimension_semantics<parallel>], iteration_bounds = array<i64: 1>, scalar_prefetch = 0 : i64, scratch_operands = 0 : i64, tpu.core_type = #tpu.core_type<tc>, window_params = [{transform_indices = @transform_0, window_bounds = array<i64: 8, 16>}, {transform_indices = @transform_1, window_bounds = array<i64: 8, 18>}]} {
    %c0 = arith.constant 0 : index
    %c0_0 = arith.constant 0 : index
    %0 = vector.load %arg1[%c0, %c0_0] : memref<8x16xf32, #tpu.memory_space<vmem>>, vector<8x16xf32>
    %cst = arith.constant 0.000000e+00 : f32
    %1 = vector.broadcast %cst : f32 to vector<8x2xf32>
    %2 = tpu.concatenate %1, %0 in 1 : vector<8x2xf32>, vector<8x16xf32> -> vector<8x18xf32>
    %c0_1 = arith.constant 0 : index
    %c0_2 = arith.constant 0 : index
    %3 = vector.load %arg2[%c0_1, %c0_2] : memref<8x18xf32, #tpu.memory_space<vmem>>, vector<8x18xf32>
    tpu.vector_store %arg2[%c0_1, %c0_2], %2 {strides = array<i32>} : memref<8x18xf32, #tpu.memory_space<vmem>>, vector<8x18xf32>,
    return
  }
  func.func @transform_0(%arg0: i32) -> (i32, i32) {
    %c0_i32 = arith.constant 0 : i32
    %c0_i32_0 = arith.constant 0 : i32
    return %arg0, %c0_i32 : i32, i32
  }
  func.func @transform_1(%arg0: i32) -> (i32, i32) {
    %c0_i32 = arith.constant 0 : i32
    %c0_i32_0 = arith.constant 0 : i32
    return %arg0, %c0_i32 : i32, i32
  }
}

</mosaic_0001>

<llo_original>
// kernel: tpu_custom_call.1
$region0: #{tpu_custom_call.1}
  #allocation0 [shape = 'u32[]', space=smem, size = 0x4, offset = 0x4, fixed_abs, tag = 'smem constant byte address 0x4 - core index']
  #allocation1 [shape = 'u32[72,128]{1,0:T(1,128)}', space=vmem, size = 0x9000, scoped, tag = 'internal scratch']
  %s0 = inlined_call_operand.hbm [shape: f32[8,16], index: 0, kind: input, shape index: {}]
  %s1 = inlined_call_operand.hbm [shape: f32[8,18], index: 1, kind: output, shape index: {}]
  %s2 = sld [smem:[#allocation0]]
  $region18: #{tpu_custom_call.1} parent=0
    _
  %s4 = ssub.s32 1, %s2
  %s5 = scalar_select 0, %s4, %s2
  $region1: #{tpu_custom_call.1} parent=0
    #allocation2 [shape = 'u8[4096]{0}', space=vmem, size = 0x1000, scoped, tag = 'input window, operand 0, single buffered']
    #allocation3 [shape = 's32[1]{0}', space=sflag, size = 0x4, scoped, tag = 'scoped memory for tpu_custom_call.1']
    #allocation4 [shape = 's32[1]{0}', space=sflag, size = 0x4, scoped, tag = 'scoped memory for tpu_custom_call.1']
    #allocation5 [shape = 'u8[4096]{0}', space=vmem, size = 0x1000, scoped, tag = 'output window, operand 0, single buffered']
    %6 = vsyncpa [#allocation3], 0
    %7 = vsyncpa [#allocation4], 0
    // Predicated region
    $region2: #{tpu_custom_call.1} parent=1 // pred_check
      _
    $region3: #{tpu_custom_call.1} parent=1 // pred_check_branch
      %9 = sbr.rel (0) target = $region5
    $region4: #{tpu_custom_call.1} parent=1 // pred_region
      %11 = vsyncadd [#allocation3], 0
      %s13 = sshll.u32 %s0, 4
      %s14 = int_to_ptr.hbm [resolvable:$true] %s13
      %s15 = sshll.u32 [#allocation2], 4
      %s16 = int_to_ptr.vmem [resolvable:$true] %s15
      %18 = dma.hbm_to_vmem [thread:$0]  %s14, 128, %s16, [#allocation3]
    $region5: #{tpu_custom_call.1} parent=1 // pred_fallthru
      _
    // Predicated region
    $region6: #{tpu_custom_call.1} parent=1 // pred_check
      _
    $region7: #{tpu_custom_call.1} parent=1 // pred_check_branch
      %20 = sbr.rel (0) target = $region9
    $region8: #{tpu_custom_call.1} parent=1 // pred_region
      %22 = dma.done [#allocation3], 128
    $region9: #{tpu_custom_call.1} parent=1 // pred_fallthru
      _
    %v23 = vld [vmem:[#allocation2] sm:$0xff]
    %25 = vrot.lane.b32.xlu0 %v23, 2
    %v26 = vpop.permute.xlu0 %25
    %vm28 = vcmask 15360
    %v29 = vsel %vm28, 0.0, %v26
    %vm30 = vcmask 146432
    %31 = vst.msk [vmem:[#allocation5] sm:$0xff] %vm30, %v29
    // Predicated region
    $region10: #{tpu_custom_call.1} parent=1 // pred_check
      _
    $region11: #{tpu_custom_call.1} parent=1 // pred_check_branch
      %33 = sbr.rel (0) target = $region13
    $region12: #{tpu_custom_call.1} parent=1 // pred_region
      %35 = vsyncadd [#allocation4], 0
      %s37 = sshll.u32 [#allocation5], 4
      %s38 = int_to_ptr.vmem [resolvable:$true] %s37
      %s39 = sshll.u32 %s1, 4
      %s40 = int_to_ptr.hbm [resolvable:$true] %s39
      %42 = dma.vmem_to_hbm [thread:$0]  %s38, 128, %s40, [#allocation4]
    $region13: #{tpu_custom_call.1} parent=1 // pred_fallthru
      _
    // Predicated region
    $region14: #{tpu_custom_call.1} parent=1 // pred_check
      _
    $region15: #{tpu_custom_call.1} parent=1 // pred_check_branch
      %44 = sbr.rel (0) target = $region17
    $region16: #{tpu_custom_call.1} parent=1 // pred_region
      %46 = dma.done [#allocation4], 128
    $region17: #{tpu_custom_call.1} parent=1 // pred_fallthru
      _
    %47 = vsyncpa [#allocation3], 1
    %48 = vsyncpa [#allocation4], 1

</llo_original>
